<compile_context>
chip_gen: v7x
topology: tpu7x:2x2x1
jax: 0.10.0
libtpu: 0.0.40
codegen_flags: <defaults>
</compile_context>

<pallas_src>
import jax
import jax.numpy as jnp
from jax import lax
from jax.experimental import pallas as pl
from jax.experimental.pallas import tpu as pltpu


# ---------------------------------------------------------------------------
# helpers
# ---------------------------------------------------------------------------
def _round_up(v, m):
    return ((v + m - 1) // m) * m


def _pick_tile(dim, pref, align):
    """`pref` if dim is big, else dim rounded up to `align`."""
    if dim >= pref:
        return pref
    return _round_up(dim, align)


def _pad2d(a, rows, cols):
    pr, pc = rows - a.shape[0], cols - a.shape[1]
    if pr == 0 and pc == 0:
        return a
    return jnp.pad(a, ((0, pr), (0, pc)))


# W (bf16) resident-in-VMEM threshold for the fused/forward fast paths.
_RESIDENT_W_BYTES = 8 * 1024 * 1024


# ---------------------------------------------------------------------------
# Kernel 1a: resident-weight forward  cls_score = x @ W + b
#            (whole W + b stay in VMEM; grid only over batch rows)
# ---------------------------------------------------------------------------
def _head_fwd_resident_kernel(x_ref, w_ref, b_ref, o_ref):
    o_ref[...] = (jnp.dot(x_ref[...], w_ref[...],
                          preferred_element_type=jnp.float32)
                  + b_ref[...]).astype(o_ref.dtype)


# ---------------------------------------------------------------------------
# Kernel 1b: tiled fallback (large W).  Accumulates directly into the resident
#            output block (no VMEM scratch); bias folded into the init step.
# ---------------------------------------------------------------------------
def _head_fwd_tiled_kernel(x_ref, w_ref, b_ref, o_ref):
    kk = pl.program_id(2)

    @pl.when(kk == 0)
    def _():
        o_ref[...] = jnp.broadcast_to(b_ref[...], o_ref.shape).astype(o_ref.dtype)

    o_ref[...] += jnp.dot(x_ref[...], w_ref[...],
                          preferred_element_type=jnp.float32)


def _head_forward_tiled(x, w_p, b_p, num_classes):
    """Rare fallback path when W does not comfortably fit in VMEM."""
    n, c = x.shape
    _, k_pad = w_p.shape
    tm = _pick_tile(n, 256, 16)
    tk = _pick_tile(k_pad, 256, 128)
    tc = _pick_tile(c, 512, 128)
    n_pad, k_pad2, c_pad = _round_up(n, tm), _round_up(k_pad, tk), _round_up(c, tc)

    x_p = _pad2d(x.astype(jnp.bfloat16), n_pad, c_pad)
    w_pp = _pad2d(w_p, c_pad, k_pad2)
    b_pp = _pad2d(b_p, 1, k_pad2)

    grid = (n_pad // tm, k_pad2 // tk, c_pad // tc)
    out = pl.pallas_call(
        _head_fwd_tiled_kernel,
        out_shape=jax.ShapeDtypeStruct((n_pad, k_pad2), jnp.float32),
        grid_spec=pltpu.PrefetchScalarGridSpec(
            num_scalar_prefetch=0,
            grid=grid,
            in_specs=[
                pl.BlockSpec((tm, tc), lambda i, j, kk: (i, kk)),
                pl.BlockSpec((tc, tk), lambda i, j, kk: (kk, j)),
                pl.BlockSpec((1, tk), lambda i, j, kk: (0, j)),
            ],
            out_specs=pl.BlockSpec((tm, tk), lambda i, j, kk: (i, j)),
        ),
        compiler_params=pltpu.CompilerParams(
            dimension_semantics=("parallel", "parallel", "arbitrary")),
        cost_estimate=pl.CostEstimate(
            flops=2 * n_pad * c_pad * k_pad2, transcendentals=0,
            bytes_accessed=(n_pad * c_pad * 2 + c_pad * k_pad2 * 2
                            + k_pad2 * 4 + n_pad * k_pad2 * 4)),
    )(x_p, w_pp, b_pp)
    return out[:n, :num_classes]


def head_forward(x, w_p, b_p, num_classes):
    """cls_score = x @ W + b.

    x: (N, C) any float dtype; w_p: (C, k_pad) bf16 (pre-padded at init);
    b_p: (1, k_pad) f32 (pre-padded).  Returns (N, num_classes) f32.
    """
    n, c = x.shape
    c2, k_pad = w_p.shape
    assert c == c2 and b_p.shape == (1, k_pad) and k_pad >= num_classes

    if c * k_pad * 2 > _RESIDENT_W_BYTES:
        return _head_forward_tiled(x, w_p, b_p, num_classes)

    tm = _pick_tile(n, 256, 16)           # 16-row sublane tile (bf16 packing)
    n_pad = _round_up(n, tm)
    x_p = x.astype(jnp.bfloat16)          # single cast, no f32 round-trip
    if n_pad != n:
        x_p = jnp.pad(x_p, ((0, n_pad - n), (0, 0)))

    grid = (n_pad // tm,)
    out = pl.pallas_call(
        _head_fwd_resident_kernel,
        out_shape=jax.ShapeDtypeStruct((n_pad, k_pad), jnp.float32),
        grid_spec=pltpu.PrefetchScalarGridSpec(
            num_scalar_prefetch=0,
            grid=grid,
            in_specs=[
                pl.BlockSpec((tm, c), lambda i: (i, 0)),       # x row tile
                pl.BlockSpec((c, k_pad), lambda i: (0, 0)),    # whole W resident
                pl.BlockSpec((1, k_pad), lambda i: (0, 0)),    # whole bias resident
            ],
            out_specs=pl.BlockSpec((tm, k_pad), lambda i: (i, 0)),
        ),
        compiler_params=pltpu.CompilerParams(
            dimension_semantics=("parallel",),
            vmem_limit_bytes=40 * 1024 * 1024),
        cost_estimate=pl.CostEstimate(
            flops=2 * n_pad * c * k_pad, transcendentals=0,
            bytes_accessed=(n_pad * c * 2 + c * k_pad * 2
                            + k_pad * 4 + n_pad * k_pad * 4)),
    )(x_p, w_p, b_p)
    return out[:n, :num_classes]


# ---------------------------------------------------------------------------
# Kernel 2: MeanSquaredLoss = mean((cls_score - labels)^2) * loss_weight
#           No wrapper padding: ragged N/K edges masked in-kernel.
#           Per-i-block (8,128) partial sums (VPU accumulation) -> tiny
#           jnp.sum outside.  i axis is "parallel" (v7x megacore).
# ---------------------------------------------------------------------------
def _make_mse_kernel(tm, tk, n_valid, k_valid):
    def kernel(s_ref, l_ref, part_ref):
        i, j = pl.program_id(0), pl.program_id(1)

        @pl.when(j == 0)
        def _():
            part_ref[...] = jnp.zeros_like(part_ref)

        s = s_ref[...].astype(jnp.float32)
        l = l_ref[...].astype(jnp.float32)
        row = i * tm + lax.broadcasted_iota(jnp.int32, (tm, tk), 0)
        col = j * tk + lax.broadcasted_iota(jnp.int32, (tm, tk), 1)
        mask = (row < n_valid) & (col < k_valid)
        d = jnp.where(mask, s - l, jnp.float32(0.0))
        d2 = d * d

        # Fold (tm, tk) onto an (8,128) partial with pure VPU adds
        # (aligned static slices); single cross-lane reduce happens outside.
        part = jnp.zeros((8, 128), jnp.float32)
        for r in range(tm // 8):
            for c in range(tk // 128):
                part = part + d2[r * 8:(r + 1) * 8, c * 128:(c + 1) * 128]
        part_ref[...] += part[None, :, :]

    return kernel


def mse_loss(cls_score, labels, loss_weight=1.0):
    n, k = cls_score.shape
    assert labels.shape == (n, k)
    cls_score = cls_score.astype(jnp.float32)
    labels = labels.astype(jnp.float32)

    tm = _pick_tile(n, 256, 8)
    tk = _pick_tile(k, 1024, 128)
    gi, gj = pl.cdiv(n, tm), pl.cdiv(k, tk)

    parts = pl.pallas_call(
        _make_mse_kernel(tm, tk, n, k),
        out_shape=jax.ShapeDtypeStruct((gi, 8, 128), jnp.float32),
        grid_spec=pltpu.PrefetchScalarGridSpec(
            num_scalar_prefetch=0,
            grid=(gi, gj),
            in_specs=[
                pl.BlockSpec((tm, tk), lambda i, j: (i, j)),
                pl.BlockSpec((tm, tk), lambda i, j: (i, j)),
            ],
            out_specs=pl.BlockSpec((1, 8, 128), lambda i, j: (i, 0, 0)),
        ),
        compiler_params=pltpu.CompilerParams(
            dimension_semantics=("parallel", "arbitrary")),
        cost_estimate=pl.CostEstimate(
            flops=3 * n * k, transcendentals=0,
            bytes_accessed=2 * 4 * n * k + gi * 8 * 128 * 4),
    )(cls_score, labels)

    scale = jnp.float32(float(loss_weight) / float(n * k))
    return scale * jnp.sum(parts)


# ---------------------------------------------------------------------------
# Kernel 3: fused forward + MSE loss (training path; resident W, grid over
#           batch rows only, per-i-block loss partials, fully "parallel").
# ---------------------------------------------------------------------------
def _make_fused_kernel(tm, k_pad, n_valid, k_valid):
    def kernel(x_ref, w_ref, b_ref, l_ref, o_ref, part_ref):
        i = pl.program_id(0)
        score = jnp.dot(x_ref[...], w_ref[...],
                        preferred_element_type=jnp.float32) + b_ref[...]
        # TODO(synk): make this writeback optional / bf16 when only the loss
        # is consumed (halves the dominant output HBM stream).
        o_ref[...] = score.astype(o_ref.dtype)

        lab = l_ref[...].astype(jnp.float32)
        row = i * tm + lax.broadcasted_iota(jnp.int32, (tm, k_pad), 0)
        col = lax.broadcasted_iota(jnp.int32, (tm, k_pad), 1)
        mask = (row < n_valid) & (col < k_valid)
        d = jnp.where(mask, score - lab, jnp.float32(0.0))
        d2 = d * d

        part = jnp.zeros((8, 128), jnp.float32)
        for r in range(tm // 8):
            for c in range(k_pad // 128):
                part = part + d2[r * 8:(r + 1) * 8, c * 128:(c + 1) * 128]
        part_ref[...] = part[None, :, :]

    return kernel


def head_forward_and_mse_loss(x, w_p, b_p, labels, num_classes, loss_weight=1.0):
    n, c = x.shape
    c2, k_pad = w_p.shape
    k = num_classes
    assert c == c2 and b_p.shape == (1, k_pad) and labels.shape == (n, k)
    labels = labels.astype(jnp.float32)

    if c * k_pad * 2 > _RESIDENT_W_BYTES:
        # Oversized weight: fall back to the two-kernel path.
        score = _head_forward_tiled(x, w_p, b_p, k)
        return score, mse_loss(score, labels, loss_weight)

    tm = _pick_tile(n, 256, 16)
    n_pad = _round_up(n, tm)
    x_p = x.astype(jnp.bfloat16)
    if n_pad != n:
        x_p = jnp.pad(x_p, ((0, n_pad - n), (0, 0)))
    gi = n_pad // tm

    score_p, parts = pl.pallas_call(
        _make_fused_kernel(tm, k_pad, n, k),
        out_shape=(jax.ShapeDtypeStruct((n_pad, k_pad), jnp.float32),
                   jax.ShapeDtypeStruct((gi, 8, 128), jnp.float32)),
        grid_spec=pltpu.PrefetchScalarGridSpec(
            num_scalar_prefetch=0,
            grid=(gi,),
            in_specs=[
                pl.BlockSpec((tm, c), lambda i: (i, 0)),        # x row tile
                pl.BlockSpec((c, k_pad), lambda i: (0, 0)),     # resident W
                pl.BlockSpec((1, k_pad), lambda i: (0, 0)),     # resident bias
                pl.BlockSpec((tm, k_pad), lambda i: (i, 0)),    # labels (ragged, masked)
            ],
            out_specs=(
                pl.BlockSpec((tm, k_pad), lambda i: (i, 0)),
                pl.BlockSpec((1, 8, 128), lambda i: (i, 0, 0)),
            ),
        ),
        compiler_params=pltpu.CompilerParams(
            dimension_semantics=("parallel",),
            vmem_limit_bytes=40 * 1024 * 1024),
        cost_estimate=pl.CostEstimate(
            flops=2 * n_pad * c * k_pad + 3 * n_pad * k_pad, transcendentals=0,
            bytes_accessed=(n_pad * c * 2 + c * k_pad * 2 + k_pad * 4
                            + n_pad * k_pad * 4 + n * k * 4
                            + gi * 8 * 128 * 4)),
    )(x_p, w_p, b_p, labels)

    scale = jnp.float32(float(loss_weight) / float(n * k))
    return score_p[:n, :k], scale * jnp.sum(parts)


# ---------------------------------------------------------------------------
# BaseHead equivalent
# ---------------------------------------------------------------------------
class BaseHeadPallas:
    """JAX/Pallas port of mmaction BaseHead (default MeanSquaredLoss)."""

    def __init__(self, num_classes, in_channels, loss_weight=1.0,
                 multi_class=False, label_smooth_eps=0.0):
        self.num_classes = num_classes
        self.in_channels = in_channels
        self.loss_weight = loss_weight
        self.multi_class = multi_class            # unused by MeanSquaredLoss
        self.label_smooth_eps = label_smooth_eps  # unused by MeanSquaredLoss
        self.init_weights()

    def init_weights(self):
        # Deterministic init of the canonical subclass fc layer.
        kw, _ = jax.random.split(jax.random.PRNGKey(42))
        scale = 0.01
        w = scale * jax.random.normal(
            kw, (self.in_channels, self.num_classes), dtype=jnp.float32)
        # Master weights in bf16 (halves weight-streaming bytes; MXU runs bf16).
        # TODO(synk): int8 weights for v5e/v6e MXU; fp8 on v7x (no int MXU path).
        self.weight = w.astype(jnp.bfloat16)                         # (C, K)
        self.bias = jnp.zeros((1, self.num_classes), dtype=jnp.float32)
        # Pre-padded, kernel-ready parameters (lane-dense K), built ONCE here
        # so no per-call pad/cast HBM pass over the weight.
        k_pad = _round_up(self.num_classes, 128)
        self.w_padded = _pad2d(self.weight, self.in_channels, k_pad)  # bf16
        self.b_padded = _pad2d(self.bias, 1, k_pad)                   # f32

    # TODO(synk): BaseHead.forward is abstract; this is the canonical subclass
    # implementation (linear classifier) used to exercise the kernels.
    def forward(self, x):
        return head_forward(x, self.w_padded, self.b_padded, self.num_classes)

    def loss(self, cls_score, labels, **kwargs):
        losses = {}
        labels = jnp.asarray(labels)
        # Label-shape fixups from BaseHead.loss (static-shape glue in JAX).
        if labels.ndim == 0:
            labels = labels[None]
        elif (labels.ndim == 1 and labels.shape[0] == self.num_classes
              and cls_score.shape[0] == 1):
            labels = labels[None]
        # MeanSquaredLoss needs matching shapes; broadcast the fixed-up labels.
        labels = jnp.broadcast_to(labels.astype(jnp.float32), cls_score.shape)
        losses['loss_cls'] = mse_loss(cls_score, labels, self.loss_weight)
        return losses

    def forward_and_loss(self, x, labels):
        """Fused training path: one kernel, no HBM round-trip of cls_score."""
        labels = jnp.asarray(labels, dtype=jnp.float32)
        cls_score, loss_cls = head_forward_and_mse_loss(
            x, self.w_padded, self.b_padded, labels,
            self.num_classes, self.loss_weight)
        return cls_score, {'loss_cls': loss_cls}


if __name__ == "__main__":
    batch, in_channels, num_classes = 2, 32, 8

    key = jax.random.PRNGKey(0)
    kx, kl = jax.random.split(key)
    x = jax.random.normal(kx, (batch, in_channels), dtype=jnp.float32)
    labels = jax.random.normal(kl, (batch, num_classes), dtype=jnp.float32)

    head = BaseHeadPallas(num_classes=num_classes, in_channels=in_channels)

    # Separate forward + loss (inference / BaseHead API path).
    cls_score = head.forward(x)
    losses = head.loss(cls_score, labels)

    # Fused forward + loss (training path).
    fused_score, fused_losses = head.forward_and_loss(x, labels)

    jax.block_until_ready(cls_score)
    jax.block_until_ready(losses['loss_cls'])
    jax.block_until_ready(fused_score)
    jax.block_until_ready(fused_losses['loss_cls'])

    # Reference in plain JAX (same bf16 operand rounding as the kernels).
    w32 = head.weight.astype(jnp.float32)
    x_bf = x.astype(jnp.bfloat16).astype(jnp.float32)
    ref_score = x_bf @ w32 + head.bias
    ref_loss = jnp.mean((ref_score - labels) ** 2) * head.loss_weight

    assert jnp.allclose(cls_score, ref_score, atol=1e-4, rtol=1e-4)
    assert jnp.allclose(losses['loss_cls'], ref_loss, atol=1e-4, rtol=1e-4)
    assert jnp.allclose(fused_score, ref_score, atol=1e-4, rtol=1e-4)
    assert jnp.allclose(fused_losses['loss_cls'], ref_loss, atol=1e-4, rtol=1e-4)

    print("KERNEL_OK")
</pallas_src>

<mosaic_0001>
module attributes {stable_mosaic.version = 11 : i64} {
  func.func @_head_fwd_resident_kernel(%arg0: i32, %arg1: memref<16x32xbf16, #tpu.memory_space<vmem>>, %arg2: memref<32x128xbf16, #tpu.memory_space<vmem>>, %arg3: memref<1x128xf32, #tpu.memory_space<vmem>>, %arg4: memref<16x128xf32, #tpu.memory_space<vmem>>) attributes {dimension_semantics = [#tpu.dimension_semantics<parallel>], iteration_bounds = array<i64: 1>, scalar_prefetch = 0 : i64, scratch_operands = 0 : i64, tpu.core_type = #tpu.core_type<tc>, window_params = [{transform_indices = @transform_0, window_bounds = array<i64: 16, 32>}, {pipeline_mode = #tpu.pipeline_mode<synchronous>, transform_indices = @transform_1, window_bounds = array<i64: 32, 128>}, {pipeline_mode = #tpu.pipeline_mode<synchronous>, transform_indices = @transform_2, window_bounds = array<i64: 1, 128>}, {transform_indices = @transform_3, window_bounds = array<i64: 16, 128>}]} {
    %c0 = arith.constant 0 : index
    %c0_0 = arith.constant 0 : index
    %0 = vector.load %arg1[%c0, %c0_0] : memref<16x32xbf16, #tpu.memory_space<vmem>>, vector<16x32xbf16>
    %c0_1 = arith.constant 0 : index
    %c0_2 = arith.constant 0 : index
    %1 = vector.load %arg2[%c0_1, %c0_2] : memref<32x128xbf16, #tpu.memory_space<vmem>>, vector<32x128xbf16>
    %cst = arith.constant dense<0.000000e+00> : vector<16x128xf32>
    %2 = tpu.matmul %0, %1, %cst {dimension_numbers = #tpu.dot_dimension_numbers<[1], [0], [0], [1], [0, 0, 1, 1], [], []>} : vector<16x32xbf16>, vector<32x128xbf16>, vector<16x128xf32> -> vector<16x128xf32>
    %c0_3 = arith.constant 0 : index
    %c0_4 = arith.constant 0 : index
    %3 = vector.load %arg3[%c0_3, %c0_4] : memref<1x128xf32, #tpu.memory_space<vmem>>, vector<1x128xf32>
    %4 = vector.broadcast %3 : vector<1x128xf32> to vector<16x128xf32>
    %5 = arith.addf %2, %4 : vector<16x128xf32>
    %c0_5 = arith.constant 0 : index
    %c0_6 = arith.constant 0 : index
    %6 = vector.load %arg4[%c0_5, %c0_6] : memref<16x128xf32, #tpu.memory_space<vmem>>, vector<16x128xf32>
    tpu.vector_store %arg4[%c0_5, %c0_6], %5 {strides = array<i32>} : memref<16x128xf32, #tpu.memory_space<vmem>>, vector<16x128xf32>,
    return
  }
  func.func @transform_0(%arg0: i32) -> (i32, i32) {
    %c0_i32 = arith.constant 0 : i32
    %c0_i32_0 = arith.constant 0 : i32
    return %arg0, %c0_i32 : i32, i32
  }
  func.func @transform_1(%arg0: i32) -> (i32, i32) {
    %c0_i32 = arith.constant 0 : i32
    %c0_i32_0 = arith.constant 0 : i32
    %c0_i32_1 = arith.constant 0 : i32
    return %c0_i32, %c0_i32_0 : i32, i32
  }
  func.func @transform_2(%arg0: i32) -> (i32, i32) {
    %c0_i32 = arith.constant 0 : i32
    %c0_i32_0 = arith.constant 0 : i32
    %c0_i32_1 = arith.constant 0 : i32
    return %c0_i32, %c0_i32_0 : i32, i32
  }
  func.func @transform_3(%arg0: i32) -> (i32, i32) {
    %c0_i32 = arith.constant 0 : i32
    %c0_i32_0 = arith.constant 0 : i32
    return %arg0, %c0_i32 : i32, i32
  }
}

</mosaic_0001>

<llo_original>
// kernel: tpu_custom_call.1
$region0: #{tpu_custom_call.1}
  #allocation0 [shape = 'u32[]', space=smem, size = 0x4, offset = 0x4, fixed_abs, tag = 'smem constant byte address 0x4 - core index']
  #allocation1 [shape = 'u32[144,128]{1,0:T(1,128)}', space=vmem, size = 0x12000, scoped, tag = 'internal scratch']
  %s0 = inlined_call_operand.hbm [shape: bf16[16,32], index: 0, kind: input, shape index: {}]
  %s1 = inlined_call_operand.hbm [shape: bf16[32,128], index: 1, kind: input, shape index: {}]
  %s2 = inlined_call_operand.vmem [shape: f32[1,128], index: 2, kind: input, shape index: {}]
  %s3 = inlined_call_operand.hbm [shape: f32[16,128], index: 3, kind: output, shape index: {}]
  %s4 = sld [smem:[#allocation0]]
  $region30: #{tpu_custom_call.1} parent=0
    _
  %s6 = ssub.s32 1, %s4
  %s7 = scalar_select 0, %s6, %s4
  $region1: #{tpu_custom_call.1} parent=0
    #allocation2 [shape = 'u8[4096]{0}', space=vmem, size = 0x1000, scoped, tag = 'input window, operand 0, single buffered']
    #allocation3 [shape = 's32[1]{0}', space=sflag, size = 0x4, scoped, tag = 'scoped memory for tpu_custom_call.1']
    #allocation4 [shape = 's32[1]{0}', space=sflag, size = 0x4, scoped, tag = 'scoped memory for tpu_custom_call.1']
    #allocation5 [shape = 'u8[8192]{0}', space=vmem, size = 0x2000, scoped, tag = 'input window, operand 1, single buffered']
    #allocation6 [shape = 's32[1]{0}', space=sflag, size = 0x4, scoped, tag = 'scoped memory for tpu_custom_call.1']
    #allocation7 [shape = 'u8[8192]{0}', space=vmem, size = 0x2000, scoped, tag = 'output window, operand 0, single buffered']
    %8 = vsyncpa [#allocation3], 0
    %9 = vsyncpa [#allocation6], 0
    %10 = vsyncpa [#allocation4], 0
    // Predicated region
    $region2: #{tpu_custom_call.1} parent=1 // pred_check
      _
    $region3: #{tpu_custom_call.1} parent=1 // pred_check_branch
      %12 = sbr.rel (0) target = $region5
    $region4: #{tpu_custom_call.1} parent=1 // pred_region
      %s14 = ssub.s32 128, 128
      %15 = vsyncadd [#allocation3], %s14
      %s16 = sshll.u32 [#allocation2], 4
      %s17 = int_to_ptr.vmem [resolvable:$true] %s16
      %22 = dma.hbm_to_vmem [thread:$0]  %s0, 128, %s17, [#allocation3], 64, 64, 4
    $region5: #{tpu_custom_call.1} parent=1 // pred_fallthru
      _
    // Predicated region
    $region6: #{tpu_custom_call.1} parent=1 // pred_check
      _
    $region7: #{tpu_custom_call.1} parent=1 // pred_check_branch
      %24 = sbr.rel (0) target = $region9
    $region8: #{tpu_custom_call.1} parent=1 // pred_region
      %s26 = ssub.s32 256, 256
      %27 = vsyncadd [#allocation6], %s26
      %s28 = sshll.u32 [#allocation5], 4
      %s29 = int_to_ptr.vmem [resolvable:$true] %s28
      %34 = dma.hbm_to_vmem [thread:$0]  %s1, 256, %s29, [#allocation6], 64, 64, 4
    $region9: #{tpu_custom_call.1} parent=1 // pred_fallthru
      _
    // Predicated region
    $region10: #{tpu_custom_call.1} parent=1 // pred_check
      _
    $region11: #{tpu_custom_call.1} parent=1 // pred_check_branch
      %36 = sbr.rel (0) target = $region13
    $region12: #{tpu_custom_call.1} parent=1 // pred_region
      _
    $region13: #{tpu_custom_call.1} parent=1 // pred_fallthru
      _
    // Predicated region
    $region14: #{tpu_custom_call.1} parent=1 // pred_check
      _
    $region15: #{tpu_custom_call.1} parent=1 // pred_check_branch
      %38 = sbr.rel (0) target = $region17
    $region16: #{tpu_custom_call.1} parent=1 // pred_region
      %39 = dma.done [#allocation3], 128
    $region17: #{tpu_custom_call.1} parent=1 // pred_fallthru
      _
    // Predicated region
    $region18: #{tpu_custom_call.1} parent=1 // pred_check
      _
    $region19: #{tpu_custom_call.1} parent=1 // pred_check_branch
      %41 = sbr.rel (0) target = $region21
    $region20: #{tpu_custom_call.1} parent=1 // pred_region
      %42 = dma.done [#allocation6], 256
    $region21: #{tpu_custom_call.1} parent=1 // pred_fallthru
      _
    %v44 = vld [vmem:[#allocation2] sm:$0xf]
    %v45 = vld [vmem:[#allocation2 + $0x4] sm:$0xf]
    %v46 = vld [vmem:[#allocation5] sm:$0xf]
    %v47 = vld [vmem:[#allocation5 + $0x4] sm:$0xf]
    %v48 = vld [vmem:[#allocation5 + $0x8] sm:$0xf]
    %v49 = vld [vmem:[#allocation5 + $0xc] sm:$0xf]
    %v50 = vld [vmem:[%s2] sm:$0x1]
    %v52 = vlaneseq
    %v53 = vshrl.u32 %v52, 7
    %v54 = vsub.s32 0, %v53
    %v55 = vrot.slane %v50, %v54
    %v59 = vunpack.c.l.b16 %v44
    %v60 = vunpack.c.l.b16 %v45
    %v61 = vpack.c.b16 %v60, %v59
    %v66 = vunpack.c.l.b16 %v46
    %v67 = vunpack.c.l.b16 %v47
    %v68 = vunpack.c.l.b16 %v48
    %v69 = vunpack.c.l.b16 %v49
    %v70 = vpack.c.b16 %v67, %v66
    %v71 = vpack.c.b16 %v69, %v68
    %vm74 = vcmask 261120
    %v76 = vsel %vm74, %v61, 0
    %78 = vmatprep.subr.bf16.mxu0 0
    %79 = vmatpush1.bf16.msra.mxu0 %v70
    %80 = vmatprep.subr.bf16.mxu0 0
    %81 = vmatpush1.bf16.msra.mxu0 %v71
    %82 = vmatprep.subr.bf16.mxu0 0
    %83 = vmatpush1.bf16.msra.mxu0 0
    %84 = vmatprep.subr.bf16.mxu0 0
    %85 = vmatpush1.bf16.msra.mxu0 0
    %86 = vmatprep.subr.bf16.mxu0 0
    %87 = vmatpush1.bf16.msra.mxu0 0
    %88 = vmatprep.subr.bf16.mxu0 0
    %89 = vmatpush1.bf16.msra.mxu0 0
    %90 = vmatprep.subr.bf16.mxu0 0
    %91 = vmatpush1.bf16.msra.mxu0 0
    %92 = vmatprep.subr.bf16.mxu0 0
    %93 = vmatpush1.bf16.msra.mxu0 0
    %94 = vmatprep.subr.bf16.mxu0 0
    %95 = vmatpush1.bf16.msra.mxu0 0
    %96 = vmatprep.subr.bf16.mxu0 0
    %97 = vmatpush1.bf16.msra.mxu0 0
    %98 = vmatprep.subr.bf16.mxu0 0
    %99 = vmatpush1.bf16.msra.mxu0 0
    %100 = vmatprep.subr.bf16.mxu0 0
    %101 = vmatpush1.bf16.msra.mxu0 0
    %102 = vmatprep.subr.bf16.mxu0 0
    %103 = vmatpush1.bf16.msra.mxu0 0
    %104 = vmatprep.subr.bf16.mxu0 0
    %105 = vmatpush1.bf16.msra.mxu0 0
    %106 = vmatprep.subr.bf16.mxu0 0
    %107 = vmatpush1.bf16.msra.mxu0 0
    %108 = vmatprep.subr.bf16.mxu0 0
    %109 = vmatpush1.bf16.msra.mxu0 0
    %110 = vmatprep.mubr.bf16.mxu0 0
    %111 = vmatmul.mubr.bf16.gmra.mrb[0].mxu0 %v76
    %v112 = vpop.f32.mrb[0].mxu0
    %v113 = vadd.f32 %v55, %v112
    %v114 = vpop.f32.mrb[0].mxu0
    %v115 = vpop.f32.mrb[0].mxu0
    %v116 = vadd.f32 %v55, %v115
    %v117 = vpop.f32.mrb[0].mxu0
    %118 = vdwg.mxu0
    %119 = vst [vmem:[#allocation7] sm:$0xff] %v113
    %120 = vst [vmem:[#allocation7 + $0x8] sm:$0xff] %v116
    // Predicated region
    $region22: #{tpu_custom_call.1} parent=1 // pred_check
      _
    $region23: #{tpu_custom_call.1} parent=1 // pred_check_branch
      %122 = sbr.rel (0) target = $region25
    $region24: #{tpu_custom_call.1} parent=1 // pred_region
      %s124 = ssub.s32 256, 256
      %125 = vsyncadd [#allocation4], %s124
      %s126 = sshll.u32 [#allocation7], 4
      %s127 = int_to_ptr.vmem [resolvable:$true] %s126
      %132 = dma.vmem_to_hbm [thread:$0]  %s127, 256, %s3, [#allocation4], 128, 128, 8
    $region25: #{tpu_custom_call.1} parent=1 // pred_fallthru
      _
    // Predicated region
    $region26: #{tpu_custom_call.1} parent=1 // pred_check
      _
    $region27: #{tpu_custom_call.1} parent=1 // pred_check_branch
      %134 = sbr.rel (0) target = $region29
    $region28: #{tpu_custom_call.1} parent=1 // pred_region
      %135 = dma.done [#allocation4], 256
    $region29: #{tpu_custom_call.1} parent=1 // pred_fallthru
      _
    %136 = vsyncpa [#allocation3], 1
    %137 = vsyncpa [#allocation6], 1
    %138 = vsyncpa [#allocation4], 1

</llo_original>
